<compile_context>
chip_gen: v5e
topology: v5e:2x2
jax: 0.10.0
libtpu: 0.0.40
codegen_flags: <defaults>
</compile_context>

<pallas_src>
import jax
import jax.numpy as jnp
from jax.experimental import pallas as pl
from jax.experimental.pallas import tpu as pltpu


# ---------------------------------------------------------------------------
# Kernel
# ---------------------------------------------------------------------------
def modified_mlp_kernel(x_ref, ue_ref, ur_ref,
                        w1_ref, b1_ref, w2_ref, b2_ref, w3_ref, b3_ref,
                        y_ref, xhat_ref):
    # x tile: (TB, Dp) f32 ; weights: bf16 (pre-cast in wrapper) ; biases f32.
    x = x_ref[...]                                           # (TB, Dp) f32
    xe = ue_ref[...] * x                                     # f32 elementwise (VPU)

    # h = relu(l1(Ue * x))      (dropout == identity)
    z1 = jnp.dot(xe.astype(jnp.bfloat16), w1_ref[...],
                 preferred_element_type=jnp.float32) + b1_ref[...]
    h = jnp.maximum(z1, 0.0)                                 # (TB, Hp) f32

    # y = l2(h)
    y = jnp.dot(h.astype(jnp.bfloat16), w2_ref[...],
                preferred_element_type=jnp.float32) + b2_ref[...]
    y_ref[...] = y.astype(y_ref.dtype)                       # (TB, Op)

    # x_hat = sigmoid(l3(Ur * h))   (requires D == H, as in the original code)
    hr = ur_ref[...] * h                                     # f32 elementwise
    z3 = jnp.dot(hr.astype(jnp.bfloat16), w3_ref[...],
                 preferred_element_type=jnp.float32) + b3_ref[...]
    xhat_ref[...] = jax.nn.sigmoid(z3).astype(xhat_ref.dtype)  # (TB, Dp)


# ---------------------------------------------------------------------------
# Wrapper
# ---------------------------------------------------------------------------
def _round_up(n, m):
    return (n + m - 1) // m * m


def _pad2(a, rows, cols):
    pr, pc = rows - a.shape[0], cols - a.shape[1]
    if pr or pc:
        a = jnp.pad(a, ((0, pr), (0, pc)))
    return a


def _choose_batch_tile(b8, dp, hp, op, budget_bytes=24 << 20):
    """Largest batch tile whose double-buffered residency fits the VMEM budget."""
    weight_bytes = 2 * 2 * (dp * hp + hp * op + hp * dp)      # bf16, double-buffered
    vec_bytes = 2 * 4 * (hp + op + 3 * dp)                    # biases + Ue/Ur, f32
    per_row = 2 * 4 * (dp + op + dp)                          # x, y, x_hat f32, 2x buffered
    tb = (budget_bytes - weight_bytes - vec_bytes) // per_row
    tb = max(8, min(512, tb, b8))
    return int(tb - tb % 8)


def modified_mlp(x, params, *, tb=None):
    B, D = x.shape
    H = params["w1"].shape[1]
    O = params["w2"].shape[1]
    assert params["w3"].shape == (H, D)
    # Same structural requirement as the original `Ur * h` broadcast.
    assert D == H, "reconstruction branch (Ur * h) requires input_size == hidden_size"

    # Lane-dense padding of all feature dims (multiples of 128).
    Dp = _round_up(D, 128)
    Hp = _round_up(H, 128)
    Op = _round_up(O, 128)

    if tb is None:
        tb = _choose_batch_tile(_round_up(B, 8), Dp, Hp, Op)
    tb = int(tb)
    Bp = _round_up(B, tb)

    f32 = jnp.float32
    xp = _pad2(x.astype(f32), Bp, Dp)
    ue = _pad2(params["Ue"].astype(f32), 1, Dp)
    ur = _pad2(params["Ur"].astype(f32), 1, Dp)
    # Weights cast to bf16 once here (MXU operands); biases stay f32.
    w1 = _pad2(params["w1"], Dp, Hp).astype(jnp.bfloat16)
    b1 = _pad2(params["b1"].astype(f32), 1, Hp)
    w2 = _pad2(params["w2"], Hp, Op).astype(jnp.bfloat16)
    b2 = _pad2(params["b2"].astype(f32), 1, Op)
    w3 = _pad2(params["w3"], Hp, Dp).astype(jnp.bfloat16)
    b3 = _pad2(params["b3"].astype(f32), 1, Dp)

    grid = (Bp // tb,)

    def row_spec(r, c):        # per-batch-tile blocks
        return pl.BlockSpec((r, c), lambda i: (i, 0))

    def fixed_spec(r, c):      # VMEM-resident across the whole grid
        return pl.BlockSpec((r, c), lambda i: (0, 0))

    # Advisory cost estimate for the XLA scheduler.
    flops = 2 * Bp * (Dp * Hp + Hp * Op + Hp * Dp)
    bytes_accessed = (xp.size * 4 + ue.size * 4 + ur.size * 4
                      + w1.size * 2 + w2.size * 2 + w3.size * 2
                      + b1.size * 4 + b2.size * 4 + b3.size * 4
                      + Bp * Op * 4 + Bp * Dp * 4)
    cost = pl.CostEstimate(flops=flops, transcendentals=Bp * Dp,
                           bytes_accessed=bytes_accessed)

    # Explicit VMEM budget (safe on v7x's 64 MiB as well as v5e/v6e's 128 MiB).
    vmem_need = (2 * 4 * tb * (Dp + Op + Dp)                  # x, y, x_hat (2x buffered)
                 + 2 * 2 * (Dp * Hp + Hp * Op + Hp * Dp)      # bf16 weights (2x buffered)
                 + 2 * 4 * (Hp + Op + 3 * Dp))                # biases + Ue/Ur
    vmem_limit = int(min(48 << 20, max(32 << 20, vmem_need + (4 << 20))))

    y_pad, xhat_pad = pl.pallas_call(
        modified_mlp_kernel,
        grid=grid,
        in_specs=[
            row_spec(tb, Dp),      # x tile
            fixed_spec(1, Dp),     # Ue
            fixed_spec(1, Dp),     # Ur
            fixed_spec(Dp, Hp),    # W1^T (bf16)
            fixed_spec(1, Hp),     # b1
            fixed_spec(Hp, Op),    # W2^T (bf16)
            fixed_spec(1, Op),     # b2
            fixed_spec(Hp, Dp),    # W3^T (bf16)
            fixed_spec(1, Dp),     # b3
        ],
        out_specs=(row_spec(tb, Op), row_spec(tb, Dp)),
        out_shape=(jax.ShapeDtypeStruct((Bp, Op), x.dtype),
                   jax.ShapeDtypeStruct((Bp, Dp), x.dtype)),
        compiler_params=pltpu.CompilerParams(
            dimension_semantics=("parallel",),     # megacore: batch tiles split over TCs
            vmem_limit_bytes=vmem_limit),
        cost_estimate=cost,
    )(xp, ue, ur, w1, b1, w2, b2, w3, b3)

    return y_pad[:B, :O], xhat_pad[:B, :D]


# ---------------------------------------------------------------------------
# Params / reference (f32)
# ---------------------------------------------------------------------------
def init_params(key, input_size, hidden_size, output_size):
    ks = jax.random.split(key, 7)
    Ue = jax.random.uniform(ks[0], (1, input_size), jnp.float32)   # torch.rand
    Ur = jnp.ones((1, input_size), jnp.float32)                    # torch.ones

    def lin(kw, kb, fan_in, fan_out):
        bound = 1.0 / jnp.sqrt(fan_in)
        w = jax.random.uniform(kw, (fan_in, fan_out), jnp.float32, -bound, bound)
        b = jax.random.uniform(kb, (1, fan_out), jnp.float32, -bound, bound)
        return w, b

    w1, b1 = lin(ks[1], ks[2], input_size, hidden_size)
    w2, b2 = lin(ks[3], ks[4], hidden_size, output_size)
    w3, b3 = lin(ks[5], ks[6], hidden_size, input_size)
    return dict(Ue=Ue, Ur=Ur, w1=w1, b1=b1, w2=w2, b2=b2, w3=w3, b3=b3)


def reference(x, p):
    h = jnp.maximum((p["Ue"] * x) @ p["w1"] + p["b1"], 0.0)
    y = h @ p["w2"] + p["b2"]
    x_hat = jax.nn.sigmoid((p["Ur"] * h) @ p["w3"] + p["b3"])
    return y, x_hat


if __name__ == "__main__":
    # input_size == hidden_size is required by the module's own reconstruction
    # branch (`Ur * h` broadcast).  Feature dims chosen lane-dense (128).
    B, D, H, O = 256, 128, 128, 16
    key = jax.random.PRNGKey(0)
    kx, kp = jax.random.split(key)
    x = jax.random.normal(kx, (B, D), jnp.float32)
    params = init_params(kp, D, H, O)

    # tb=128 -> grid of 2 batch tiles, exercising pipelining + the parallel axis.
    y, x_hat = modified_mlp(x, params, tb=128)
    jax.block_until_ready((y, x_hat))

    y_ref, xhat_ref = reference(x, params)
    assert y.shape == (B, O) and x_hat.shape == (B, D)
    # bf16 MXU operands with f32 accumulation -> loose-ish tolerance vs f32 ref.
    assert jnp.allclose(y, y_ref, atol=2e-2, rtol=2e-2), \
        float(jnp.max(jnp.abs(y - y_ref)))
    assert jnp.allclose(x_hat, xhat_ref, atol=2e-2, rtol=2e-2), \
        float(jnp.max(jnp.abs(x_hat - xhat_ref)))
    print("KERNEL_OK")
</pallas_src>

<mosaic_0001>
module attributes {stable_mosaic.version = 11 : i64} {
  func.func @modified_mlp_kernel(%arg0: i32, %arg1: memref<128x128xf32, #tpu.memory_space<vmem>>, %arg2: memref<1x128xf32, #tpu.memory_space<vmem>>, %arg3: memref<1x128xf32, #tpu.memory_space<vmem>>, %arg4: memref<128x128xbf16, #tpu.memory_space<vmem>>, %arg5: memref<1x128xf32, #tpu.memory_space<vmem>>, %arg6: memref<128x128xbf16, #tpu.memory_space<vmem>>, %arg7: memref<1x128xf32, #tpu.memory_space<vmem>>, %arg8: memref<128x128xbf16, #tpu.memory_space<vmem>>, %arg9: memref<1x128xf32, #tpu.memory_space<vmem>>, %arg10: memref<128x128xf32, #tpu.memory_space<vmem>>, %arg11: memref<128x128xf32, #tpu.memory_space<vmem>>) attributes {dimension_semantics = [#tpu.dimension_semantics<parallel>], iteration_bounds = array<i64: 2>, scalar_prefetch = 0 : i64, scratch_operands = 0 : i64, tpu.core_type = #tpu.core_type<tc>, window_params = [{transform_indices = @transform_0, window_bounds = array<i64: 128, 128>}, {pipeline_mode = #tpu.pipeline_mode<synchronous>, transform_indices = @transform_1, window_bounds = array<i64: 1, 128>}, {pipeline_mode = #tpu.pipeline_mode<synchronous>, transform_indices = @transform_2, window_bounds = array<i64: 1, 128>}, {pipeline_mode = #tpu.pipeline_mode<synchronous>, transform_indices = @transform_3, window_bounds = array<i64: 128, 128>}, {pipeline_mode = #tpu.pipeline_mode<synchronous>, transform_indices = @transform_4, window_bounds = array<i64: 1, 128>}, {pipeline_mode = #tpu.pipeline_mode<synchronous>, transform_indices = @transform_5, window_bounds = array<i64: 128, 128>}, {pipeline_mode = #tpu.pipeline_mode<synchronous>, transform_indices = @transform_6, window_bounds = array<i64: 1, 128>}, {pipeline_mode = #tpu.pipeline_mode<synchronous>, transform_indices = @transform_7, window_bounds = array<i64: 128, 128>}, {pipeline_mode = #tpu.pipeline_mode<synchronous>, transform_indices = @transform_8, window_bounds = array<i64: 1, 128>}, {transform_indices = @transform_9, window_bounds = array<i64: 128, 128>}, {transform_indices = @transform_10, window_bounds = array<i64: 128, 128>}]} {
    %c0 = arith.constant 0 : index
    %c0_0 = arith.constant 0 : index
    %0 = vector.load %arg1[%c0, %c0_0] : memref<128x128xf32, #tpu.memory_space<vmem>>, vector<128x128xf32>
    %c0_1 = arith.constant 0 : index
    %c0_2 = arith.constant 0 : index
    %1 = vector.load %arg2[%c0_1, %c0_2] : memref<1x128xf32, #tpu.memory_space<vmem>>, vector<1x128xf32>
    %2 = vector.broadcast %1 : vector<1x128xf32> to vector<128x128xf32>
    %3 = arith.mulf %2, %0 : vector<128x128xf32>
    %4 = arith.truncf %3 : vector<128x128xf32> to vector<128x128xbf16>
    %c0_3 = arith.constant 0 : index
    %c0_4 = arith.constant 0 : index
    %5 = vector.load %arg4[%c0_3, %c0_4] : memref<128x128xbf16, #tpu.memory_space<vmem>>, vector<128x128xbf16>
    %cst = arith.constant dense<0.000000e+00> : vector<128x128xf32>
    %6 = tpu.matmul %4, %5, %cst {dimension_numbers = #tpu.dot_dimension_numbers<[1], [0], [0], [1], [0, 0, 1, 1], [], []>} : vector<128x128xbf16>, vector<128x128xbf16>, vector<128x128xf32> -> vector<128x128xf32>
    %c0_5 = arith.constant 0 : index
    %c0_6 = arith.constant 0 : index
    %7 = vector.load %arg5[%c0_5, %c0_6] : memref<1x128xf32, #tpu.memory_space<vmem>>, vector<1x128xf32>
    %8 = vector.broadcast %7 : vector<1x128xf32> to vector<128x128xf32>
    %9 = arith.addf %6, %8 : vector<128x128xf32>
    %cst_7 = arith.constant 0.000000e+00 : f32
    %10 = vector.broadcast %cst_7 : f32 to vector<128x128xf32>
    %11 = arith.maximumf %9, %10 : vector<128x128xf32>
    %12 = arith.truncf %11 : vector<128x128xf32> to vector<128x128xbf16>
    %c0_8 = arith.constant 0 : index
    %c0_9 = arith.constant 0 : index
    %13 = vector.load %arg6[%c0_8, %c0_9] : memref<128x128xbf16, #tpu.memory_space<vmem>>, vector<128x128xbf16>
    %cst_10 = arith.constant dense<0.000000e+00> : vector<128x128xf32>
    %14 = tpu.matmul %12, %13, %cst_10 {dimension_numbers = #tpu.dot_dimension_numbers<[1], [0], [0], [1], [0, 0, 1, 1], [], []>} : vector<128x128xbf16>, vector<128x128xbf16>, vector<128x128xf32> -> vector<128x128xf32>
    %c0_11 = arith.constant 0 : index
    %c0_12 = arith.constant 0 : index
    %15 = vector.load %arg7[%c0_11, %c0_12] : memref<1x128xf32, #tpu.memory_space<vmem>>, vector<1x128xf32>
    %16 = vector.broadcast %15 : vector<1x128xf32> to vector<128x128xf32>
    %17 = arith.addf %14, %16 : vector<128x128xf32>
    %c0_13 = arith.constant 0 : index
    %c0_14 = arith.constant 0 : index
    %18 = vector.load %arg10[%c0_13, %c0_14] : memref<128x128xf32, #tpu.memory_space<vmem>>, vector<128x128xf32>
    tpu.vector_store %arg10[%c0_13, %c0_14], %17 {strides = array<i32>} : memref<128x128xf32, #tpu.memory_space<vmem>>, vector<128x128xf32>,
    %c0_15 = arith.constant 0 : index
    %c0_16 = arith.constant 0 : index
    %19 = vector.load %arg3[%c0_15, %c0_16] : memref<1x128xf32, #tpu.memory_space<vmem>>, vector<1x128xf32>
    %20 = vector.broadcast %19 : vector<1x128xf32> to vector<128x128xf32>
    %21 = arith.mulf %20, %11 : vector<128x128xf32>
    %22 = arith.truncf %21 : vector<128x128xf32> to vector<128x128xbf16>
    %c0_17 = arith.constant 0 : index
    %c0_18 = arith.constant 0 : index
    %23 = vector.load %arg8[%c0_17, %c0_18] : memref<128x128xbf16, #tpu.memory_space<vmem>>, vector<128x128xbf16>
    %cst_19 = arith.constant dense<0.000000e+00> : vector<128x128xf32>
    %24 = tpu.matmul %22, %23, %cst_19 {dimension_numbers = #tpu.dot_dimension_numbers<[1], [0], [0], [1], [0, 0, 1, 1], [], []>} : vector<128x128xbf16>, vector<128x128xbf16>, vector<128x128xf32> -> vector<128x128xf32>
    %c0_20 = arith.constant 0 : index
    %c0_21 = arith.constant 0 : index
    %25 = vector.load %arg9[%c0_20, %c0_21] : memref<1x128xf32, #tpu.memory_space<vmem>>, vector<1x128xf32>
    %26 = vector.broadcast %25 : vector<1x128xf32> to vector<128x128xf32>
    %27 = arith.addf %24, %26 : vector<128x128xf32>
    %28 = arith.negf %27 : vector<128x128xf32>
    %29 = math.exp %28 : vector<128x128xf32>
    %cst_22 = arith.constant 1.000000e+00 : f32
    %30 = vector.broadcast %cst_22 : f32 to vector<128x128xf32>
    %31 = arith.addf %30, %29 : vector<128x128xf32>
    %32 = arith.divf %30, %31 : vector<128x128xf32>
    %c0_23 = arith.constant 0 : index
    %c0_24 = arith.constant 0 : index
    %33 = vector.load %arg11[%c0_23, %c0_24] : memref<128x128xf32, #tpu.memory_space<vmem>>, vector<128x128xf32>
    tpu.vector_store %arg11[%c0_23, %c0_24], %32 {strides = array<i32>} : memref<128x128xf32, #tpu.memory_space<vmem>>, vector<128x128xf32>,
    return
  }
  func.func @transform_0(%arg0: i32) -> (i32, i32) {
    %c0_i32 = arith.constant 0 : i32
    %c0_i32_0 = arith.constant 0 : i32
    return %arg0, %c0_i32 : i32, i32
  }
  func.func @transform_1(%arg0: i32) -> (i32, i32) {
    %c0_i32 = arith.constant 0 : i32
    %c0_i32_0 = arith.constant 0 : i32
    %c0_i32_1 = arith.constant 0 : i32
    return %c0_i32, %c0_i32_0 : i32, i32
  }
  func.func @transform_2(%arg0: i32) -> (i32, i32) {
    %c0_i32 = arith.constant 0 : i32
    %c0_i32_0 = arith.constant 0 : i32
    %c0_i32_1 = arith.constant 0 : i32
    return %c0_i32, %c0_i32_0 : i32, i32
  }
  func.func @transform_3(%arg0: i32) -> (i32, i32) {
    %c0_i32 = arith.constant 0 : i32
    %c0_i32_0 = arith.constant 0 : i32
    %c0_i32_1 = arith.constant 0 : i32
    return %c0_i32, %c0_i32_0 : i32, i32
  }
  func.func @transform_4(%arg0: i32) -> (i32, i32) {
    %c0_i32 = arith.constant 0 : i32
    %c0_i32_0 = arith.constant 0 : i32
    %c0_i32_1 = arith.constant 0 : i32
    return %c0_i32, %c0_i32_0 : i32, i32
  }
  func.func @transform_5(%arg0: i32) -> (i32, i32) {
    %c0_i32 = arith.constant 0 : i32
    %c0_i32_0 = arith.constant 0 : i32
    %c0_i32_1 = arith.constant 0 : i32
    return %c0_i32, %c0_i32_0 : i32, i32
  }
  func.func @transform_6(%arg0: i32) -> (i32, i32) {
    %c0_i32 = arith.constant 0 : i32
    %c0_i32_0 = arith.constant 0 : i32
    %c0_i32_1 = arith.constant 0 : i32
    return %c0_i32, %c0_i32_0 : i32, i32
  }
  func.func @transform_7(%arg0: i32) -> (i32, i32) {
    %c0_i32 = arith.constant 0 : i32
    %c0_i32_0 = arith.constant 0 : i32
    %c0_i32_1 = arith.constant 0 : i32
    return %c0_i32, %c0_i32_0 : i32, i32
  }
  func.func @transform_8(%arg0: i32) -> (i32, i32) {
    %c0_i32 = arith.constant 0 : i32
    %c0_i32_0 = arith.constant 0 : i32
    %c0_i32_1 = arith.constant 0 : i32
    return %c0_i32, %c0_i32_0 : i32, i32
  }
  func.func @transform_9(%arg0: i32) -> (i32, i32) {
    %c0_i32 = arith.constant 0 : i32
    %c0_i32_0 = arith.constant 0 : i32
    return %arg0, %c0_i32 : i32, i32
  }
  func.func @transform_10(%arg0: i32) -> (i32, i32) {
    %c0_i32 = arith.constant 0 : i32
    %c0_i32_0 = arith.constant 0 : i32
    return %arg0, %c0_i32 : i32, i32
  }
}

</mosaic_0001>

<llo_original>
// kernel: tpu_custom_call.1
$region0: #{tpu_custom_call.1}
  #allocation0 [shape = 'u32[]', space=smem, size = 0x4, offset = 0x4, fixed_abs, tag = 'smem constant byte address 0x4 - core index']
  #allocation1 [shape = 'u32[72,128]{1,0:T(1,128)}', space=vmem, size = 0x9000, scoped, tag = 'internal scratch']
  %s0 = inlined_call_operand.hbm [shape: f32[256,128], index: 0, kind: input, shape index: {}]
  %s1 = inlined_call_operand.hbm [shape: f32[1,128], index: 1, kind: input, shape index: {}]
  %s2 = inlined_call_operand.vmem [shape: f32[1,128], index: 2, kind: input, shape index: {}]
  %s3 = inlined_call_operand.hbm [shape: bf16[128,128], index: 3, kind: input, shape index: {}]
  %s4 = inlined_call_operand.vmem [shape: f32[1,128], index: 4, kind: input, shape index: {}]
  %s5 = inlined_call_operand.hbm [shape: bf16[128,128], index: 5, kind: input, shape index: {}]
  %s6 = inlined_call_operand.vmem [shape: f32[1,128], index: 6, kind: input, shape index: {}]
  %s7 = inlined_call_operand.hbm [shape: bf16[128,128], index: 7, kind: input, shape index: {}]
  %s8 = inlined_call_operand.vmem [shape: f32[1,128], index: 8, kind: input, shape index: {}]
  %s9 = inlined_call_operand.hbm [shape: f32[256,128], index: 9, kind: output, shape index: {0}]
  %s10 = inlined_call_operand.hbm [shape: f32[256,128], index: 10, kind: output, shape index: {1}]
  %11 = xla_tuple %s9, %s10
  %s12 = sld [smem:[#allocation0]]
  $region97: #{tpu_custom_call.1} parent=0
    _
  %s14 = ssub.s32 1, %s12
  %s15 = scalar_select 0, %s14, %s12
  $region1: #{tpu_custom_call.1} parent=0
    #allocation2 [shape = 'u8[131072]{0}', space=vmem, size = 0x20000, scoped, tag = 'input window, operand 0']
    #allocation3 [shape = 's32[2]{0}', space=sflag, size = 0x8, scoped, tag = 'scoped memory for tpu_custom_call.1']
    #allocation4 [shape = 's32[2]{0}', space=sflag, size = 0x8, scoped, tag = 'scoped memory for tpu_custom_call.1']
    #allocation5 [shape = 'u8[512]{0}', space=vmem, size = 0x400, scoped, tag = 'input window, operand 1, single buffered']
    #allocation6 [shape = 's32[1]{0}', space=sflag, size = 0x4, scoped, tag = 'scoped memory for tpu_custom_call.1']
    #allocation7 [shape = 'u8[32768]{0}', space=vmem, size = 0x8000, scoped, tag = 'input window, operand 3, single buffered']
    #allocation8 [shape = 'u8[32768]{0}', space=vmem, size = 0x8000, scoped, tag = 'input window, operand 5, single buffered']
    #allocation9 [shape = 's32[1]{0}', space=sflag, size = 0x4, scoped, tag = 'scoped memory for tpu_custom_call.1']
    #allocation10 [shape = 'u8[32768]{0}', space=vmem, size = 0x8000, scoped, tag = 'input window, operand 7, single buffered']
    #allocation11 [shape = 'u8[131072]{0}', space=vmem, size = 0x20000, scoped, tag = 'output window, operand 0']
    #allocation12 [shape = 'u8[131072]{0}', space=vmem, size = 0x20000, scoped, tag = 'output window, operand 1']
    #allocation13 [shape = 's32[2]{0}', space=sflag, size = 0x8, scoped, tag = 'scoped memory for tpu_custom_call.1']
    %16 = vsyncpa [#allocation3], 0
    %s17 = scalar_lea.sflag [#allocation3], 1
    %18 = vsyncpa %s17, 0
    %19 = vsyncpa [#allocation6], 0
    %20 = vsyncpa [#allocation9], 0
    %21 = vsyncpa [#allocation4], 0
    %s22 = scalar_lea.sflag [#allocation4], 1
    %23 = vsyncpa %s22, 0
    %24 = vsyncpa [#allocation13], 0
    %s25 = scalar_lea.sflag [#allocation13], 1
    %26 = vsyncpa %s25, 0
    loop: start=0, step=1, limit=4
    $region2: #{tpu_custom_call.1} parent=1 // loop_pre_header
      _
    $region3: #{tpu_custom_call.1} parent=1 // loop_header
      %s28 = sphi 0, %s32
      %p29 = scmp.ge.s32.totalorder %s28, 4
      %s38 = sphi 0, %s40
      %s41 = sphi 0, %s38
      %s42 = sphi 0, %s41
      %s58 = sphi 0, %s42
      %s62 = sphi 0, %s62
      %s64 = sphi 0, %s62
      %s65 = sphi 0, %s64
      %s79 = sphi 0, %s65
      %s83 = sphi 0, %s83
      %s85 = sphi 0, %s83
      %s86 = sphi 0, %s85
      %s100 = sphi 0, %s86
      %s104 = sphi 0, %s104
      %s106 = sphi 0, %s104
      %s107 = sphi 0, %s106
      %s121 = sphi 0, %s107
      %s125 = sphi 0, %s125
      %s127 = sphi 0, %s125
      %s128 = sphi 0, %s127
      %s142 = sphi 0, %s128
      %s146 = sphi 0, %s146
      %s148 = sphi 0, %s146
      %s149 = sphi 0, %s148
      %s163 = sphi 0, %s149
      %s167 = sphi 0, %s167
      %s169 = sphi 0, %s167
      %s170 = sphi 0, %s169
      %s184 = sphi 0, %s170
      %s188 = sphi 0, %s188
      %s190 = sphi 0, %s188
      %s191 = sphi 0, %s190
      %s205 = sphi 0, %s191
      %s209 = sphi 0, %s209
      %s211 = sphi 0, %s209
      %s212 = sphi 0, %s211
      %s226 = sphi 0, %s212
      %s232 = sphi 0, %s234
      %s235 = sphi 0, %s232
      %s236 = sphi 0, %s235
      %s252 = sphi 0, %s236
      %s258 = sphi 0, %s260
      %s261 = sphi 0, %s258
      %s262 = sphi 0, %s261
      %s278 = sphi 0, %s262
    $region4: #{tpu_custom_call.1} parent=1 // loop_header_branch
      %31 = sbr.rel (%p29) target = $region8
    $region5: #{tpu_custom_call.1} parent=1 // loop_body
      %s33 = ssub.s32 %s28, 1
      %s34 = ssub.s32 %s28, 2
      %s35 = sadd.s32 %s28, 1
      %s36 = ssub.s32 %s28, %s35
      %p37 = scmp.eq.s32.totalorder %s36, 0
      %s39 = sadd.s32 %s38, 1
      %s40 = scalar_select %p37, %s38, %s39
      %p43 = pneg %p37
      %p44 = scmp.eq.s32.totalorder %s28, 1
      %p45 = por %p43, %p44
      %p46 = scmp.ne.s32.totalorder %s38, %s41
      %p47 = scmp.eq.s32.totalorder %s28, 0
      %p48 = por %p46, %p47
      %p49 = scmp.ne.s32.totalorder %s38, %s41
      %p50 = scmp.eq.s32.totalorder %s33, 1
      %p51 = por %p49, %p50
      %p52 = scmp.ne.s32.totalorder %s41, %s42
      %p53 = scmp.eq.s32.totalorder %s33, 0
      %p54 = por %p52, %p53
      %p55 = scmp.ne.s32.totalorder %s41, %s42
      %p56 = scmp.eq.s32.totalorder %s34, 1
      %p57 = por %p55, %p56
      %p59 = scmp.ne.s32.totalorder %s42, %s58
      %p60 = scmp.eq.s32.totalorder %s34, 0
      %p61 = por %p59, %p60
      %s63 = sadd.s32 %s62, 1
      %p66 = scmp.eq.s32.totalorder %s28, 1
      %p67 = scmp.ne.s32.totalorder %s62, %s64
      %p68 = scmp.eq.s32.totalorder %s28, 0
      %p69 = por %p67, %p68
      %p70 = scmp.ne.s32.totalorder %s62, %s64
      %p71 = scmp.eq.s32.totalorder %s33, 1
      %p72 = por %p70, %p71
      %p73 = scmp.ne.s32.totalorder %s64, %s65
      %p74 = scmp.eq.s32.totalorder %s33, 0
      %p75 = por %p73, %p74
      %p76 = scmp.ne.s32.totalorder %s64, %s65
      %p77 = scmp.eq.s32.totalorder %s34, 1
      %p78 = por %p76, %p77
      %p80 = scmp.ne.s32.totalorder %s65, %s79
      %p81 = scmp.eq.s32.totalorder %s34, 0
      %p82 = por %p80, %p81
      %s84 = sadd.s32 %s83, 1
      %p87 = scmp.eq.s32.totalorder %s28, 1
      %p88 = scmp.ne.s32.totalorder %s83, %s85
      %p89 = scmp.eq.s32.totalorder %s28, 0
      %p90 = por %p88, %p89
      %p91 = scmp.ne.s32.totalorder %s83, %s85
      %p92 = scmp.eq.s32.totalorder %s33, 1
      %p93 = por %p91, %p92
      %p94 = scmp.ne.s32.totalorder %s85, %s86
      %p95 = scmp.eq.s32.totalorder %s33, 0
      %p96 = por %p94, %p95
      %p97 = scmp.ne.s32.totalorder %s85, %s86
      %p98 = scmp.eq.s32.totalorder %s34, 1
      %p99 = por %p97, %p98
      %p101 = scmp.ne.s32.totalorder %s86, %s100
      %p102 = scmp.eq.s32.totalorder %s34, 0
      %p103 = por %p101, %p102
      %s105 = sadd.s32 %s104, 1
      %p108 = scmp.eq.s32.totalorder %s28, 1
      %p109 = scmp.ne.s32.totalorder %s104, %s106
      %p110 = scmp.eq.s32.totalorder %s28, 0
      %p111 = por %p109, %p110
      %p112 = scmp.ne.s32.totalorder %s104, %s106
      %p113 = scmp.eq.s32.totalorder %s33, 1
      %p114 = por %p112, %p113
      %p115 = scmp.ne.s32.totalorder %s106, %s107
      %p116 = scmp.eq.s32.totalorder %s33, 0
      %p117 = por %p115, %p116
      %p118 = scmp.ne.s32.totalorder %s106, %s107
      %p119 = scmp.eq.s32.totalorder %s34, 1
      %p120 = por %p118, %p119
      %p122 = scmp.ne.s32.totalorder %s107, %s121
      %p123 = scmp.eq.s32.totalorder %s34, 0
      %p124 = por %p122, %p123
      %s126 = sadd.s32 %s125, 1
      %p129 = scmp.eq.s32.totalorder %s28, 1
      %p130 = scmp.ne.s32.totalorder %s125, %s127
      %p131 = scmp.eq.s32.totalorder %s28, 0
      %p132 = por %p130, %p131
      %p133 = scmp.ne.s32.totalorder %s125, %s127
      %p134 = scmp.eq.s32.totalorder %s33, 1
      %p135 = por %p133, %p134
      %p136 = scmp.ne.s32.totalorder %s127, %s128
      %p137 = scmp.eq.s32.totalorder %s33, 0
      %p138 = por %p136, %p137
      %p139 = scmp.ne.s32.totalorder %s127, %s128
      %p140 = scmp.eq.s32.totalorder %s34, 1
      %p141 = por %p139, %p140
      %p143 = scmp.ne.s32.totalorder %s128, %s142
      %p144 = scmp.eq.s32.totalorder %s34, 0
      %p145 = por %p143, %p144
      %s147 = sadd.s32 %s146, 1
      %p150 = scmp.eq.s32.totalorder %s28, 1
      %p151 = scmp.ne.s32.totalorder %s146, %s148
      %p152 = scmp.eq.s32.totalorder %s28, 0
      %p153 = por %p151, %p152
      %p154 = scmp.ne.s32.totalorder %s146, %s148
      %p155 = scmp.eq.s32.totalorder %s33, 1
      %p156 = por %p154, %p155
      %p157 = scmp.ne.s32.totalorder %s148, %s149
      %p158 = scmp.eq.s32.totalorder %s33, 0
      %p159 = por %p157, %p158
      %p160 = scmp.ne.s32.totalorder %s148, %s149
      %p161 = scmp.eq.s32.totalorder %s34, 1
      %p162 = por %p160, %p161
      %p164 = scmp.ne.s32.totalorder %s149, %s163
      %p165 = scmp.eq.s32.totalorder %s34, 0
      %p166 = por %p164, %p165
      %s168 = sadd.s32 %s167, 1
      %p171 = scmp.eq.s32.totalorder %s28, 1
      %p172 = scmp.ne.s32.totalorder %s167, %s169
      %p173 = scmp.eq.s32.totalorder %s28, 0
      %p174 = por %p172, %p173
      %p175 = scmp.ne.s32.totalorder %s167, %s169
      %p176 = scmp.eq.s32.totalorder %s33, 1
      %p177 = por %p175, %p176
      %p178 = scmp.ne.s32.totalorder %s169, %s170
      %p179 = scmp.eq.s32.totalorder %s33, 0
      %p180 = por %p178, %p179
      %p181 = scmp.ne.s32.totalorder %s169, %s170
      %p182 = scmp.eq.s32.totalorder %s34, 1
      %p183 = por %p181, %p182
      %p185 = scmp.ne.s32.totalorder %s170, %s184
      %p186 = scmp.eq.s32.totalorder %s34, 0
      %p187 = por %p185, %p186
      %s189 = sadd.s32 %s188, 1
      %p192 = scmp.eq.s32.totalorder %s28, 1
      %p193 = scmp.ne.s32.totalorder %s188, %s190
      %p194 = scmp.eq.s32.totalorder %s28, 0
      %p195 = por %p193, %p194
      %p196 = scmp.ne.s32.totalorder %s188, %s190
      %p197 = scmp.eq.s32.totalorder %s33, 1
      %p198 = por %p196, %p197
      %p199 = scmp.ne.s32.totalorder %s190, %s191
      %p200 = scmp.eq.s32.totalorder %s33, 0
      %p201 = por %p199, %p200
      %p202 = scmp.ne.s32.totalorder %s190, %s191
      %p203 = scmp.eq.s32.totalorder %s34, 1
      %p204 = por %p202, %p203
      %p206 = scmp.ne.s32.totalorder %s191, %s205
      %p207 = scmp.eq.s32.totalorder %s34, 0
      %p208 = por %p206, %p207
      %s210 = sadd.s32 %s209, 1
      %p213 = scmp.eq.s32.totalorder %s28, 1
      %p214 = scmp.ne.s32.totalorder %s209, %s211
      %p215 = scmp.eq.s32.totalorder %s28, 0
      %p216 = por %p214, %p215
      %p217 = scmp.ne.s32.totalorder %s209, %s211
      %p218 = scmp.eq.s32.totalorder %s33, 1
      %p219 = por %p217, %p218
      %p220 = scmp.ne.s32.totalorder %s211, %s212
      %p221 = scmp.eq.s32.totalorder %s33, 0
      %p222 = por %p220, %p221
      %p223 = scmp.ne.s32.totalorder %s211, %s212
      %p224 = scmp.eq.s32.totalorder %s34, 1
      %p225 = por %p223, %p224
      %p227 = scmp.ne.s32.totalorder %s212, %s226
      %p228 = scmp.eq.s32.totalorder %s34, 0
      %p229 = por %p227, %p228
      %s230 = ssub.s32 %s28, %s35
      %p231 = scmp.eq.s32.totalorder %s230, 0
      %s233 = sadd.s32 %s232, 1
      %s234 = scalar_select %p231, %s232, %s233
      %p237 = pneg %p231
      %p238 = scmp.eq.s32.totalorder %s28, 1
      %p239 = por %p237, %p238
      %p240 = scmp.ne.s32.totalorder %s232, %s235
      %p241 = scmp.eq.s32.totalorder %s28, 0
      %p242 = por %p240, %p241
      %p243 = scmp.ne.s32.totalorder %s232, %s235
      %p244 = scmp.eq.s32.totalorder %s33, 1
      %p245 = por %p243, %p244
      %p246 = scmp.ne.s32.totalorder %s235, %s236
      %p247 = scmp.eq.s32.totalorder %s33, 0
      %p248 = por %p246, %p247
      %p249 = scmp.ne.s32.totalorder %s235, %s236
      %p250 = scmp.eq.s32.totalorder %s34, 1
      %p251 = por %p249, %p250
      %p253 = scmp.ne.s32.totalorder %s236, %s252
      %p254 = scmp.eq.s32.totalorder %s34, 0
      %p255 = por %p253, %p254
      %s256 = ssub.s32 %s28, %s35
      %p257 = scmp.eq.s32.totalorder %s256, 0
      %s259 = sadd.s32 %s258, 1
      %s260 = scalar_select %p257, %s258, %s259
      %p263 = pneg %p257
      %p264 = scmp.eq.s32.totalorder %s28, 1
      %p265 = por %p263, %p264
      %p266 = scmp.ne.s32.totalorder %s258, %s261
      %p267 = scmp.eq.s32.totalorder %s28, 0
      %p268 = por %p266, %p267
      %p269 = scmp.ne.s32.totalorder %s258, %s261
      %p270 = scmp.eq.s32.totalorder %s33, 1
      %p271 = por %p269, %p270
      %p272 = scmp.ne.s32.totalorder %s261, %s262
      %p273 = scmp.eq.s32.totalorder %s33, 0
      %p274 = por %p272, %p273
      %p275 = scmp.ne.s32.totalorder %s261, %s262
      %p276 = scmp.eq.s32.totalorder %s34, 1
      %p277 = por %p275, %p276
      %p279 = scmp.ne.s32.totalorder %s262, %s278
      %p280 = scmp.eq.s32.totalorder %s34, 0
      %p281 = por %p279, %p280
      %p282 = scmp.le.s32.totalorder 1, %s28
      %p283 = scmp.lt.s32.totalorder %s28, 3
      %p284 = pnand %p282, %p283
      %p285 = pneg %p284
      // Predicated region
      $region9: #{tpu_custom_call.1} parent=5 // pred_check
        _
      $region10: #{tpu_custom_call.1} parent=5 // pred_check_branch
        %287 = sbr.rel (%p284) target = $region12
      $region11: #{tpu_custom_call.1} parent=5 // pred_region
        %s288 = ssub.s32 %s28, 1
        // Predicated region
        $region13: #{tpu_custom_call.1} parent=11 // pred_check
          %p289 = pneg %p75
        $region14: #{tpu_custom_call.1} parent=11 // pred_check_branch
          %291 = sbr.rel (%p289) target = $region16
        $region15: #{tpu_custom_call.1} parent=11 // pred_region
          %293 = vsyncadd [#allocation6], 0
          %s295 = sshll.u32 %s1, 4
          %s296 = int_to_ptr.hbm [resolvable:$true] %s295
          %s297 = sshll.u32 [#allocation5], 4
          %s298 = int_to_ptr.vmem [resolvable:$true] %s297
          %300 = dma.hbm_to_vmem [thread:$0]  %s296, 16, %s298, [#allocation6]
        $region16: #{tpu_custom_call.1} parent=11 // pred_fallthru
          _
        // Predicated region
        $region17: #{tpu_custom_call.1} parent=11 // pred_check
          %p301 = pneg %p96
        $region18: #{tpu_custom_call.1} parent=11 // pred_check_branch
          %303 = sbr.rel (%p301) target = $region20
        $region19: #{tpu_custom_call.1} parent=11 // pred_region
          _
        $region20: #{tpu_custom_call.1} parent=11 // pred_fallthru
          _
        // Predicated region
        $region21: #{tpu_custom_call.1} parent=11 // pred_check
          %p304 = pneg %p117
        $region22: #{tpu_custom_call.1} parent=11 // pred_check_branch
          %306 = sbr.rel (%p304) target = $region24
        $region23: #{tpu_custom_call.1} parent=11 // pred_region
          %308 = vsyncadd [#allocation6], 0
          %s309 = sshll.u32 %s3, 4
          %s310 = int_to_ptr.hbm [resolvable:$true] %s309
          %s311 = sshll.u32 [#allocation7], 4
          %s312 = int_to_ptr.vmem [resolvable:$true] %s311
          %317 = dma.hbm_to_vmem [thread:$0]  %s310, 1024, %s312, [#allocation6], 64, 64, 4
        $region24: #{tpu_custom_call.1} parent=11 // pred_fallthru
          _
        // Predicated region
        $region25: #{tpu_custom_call.1} parent=11 // pred_check
          %p318 = pneg %p138
        $region26: #{tpu_custom_call.1} parent=11 // pred_check_branch
          %320 = sbr.rel (%p318) target = $region28
        $region27: #{tpu_custom_call.1} parent=11 // pred_region
          _
        $region28: #{tpu_custom_call.1} parent=11 // pred_fallthru
          _
        // Predicated region
        $region29: #{tpu_custom_call.1} parent=11 // pred_check
          %p321 = pneg %p159
        $region30: #{tpu_custom_call.1} parent=11 // pred_check_branch
          %323 = sbr.rel (%p321) target = $region32
        $region31: #{tpu_custom_call.1} parent=11 // pred_region
          %325 = vsyncadd [#allocation9], 0
          %s326 = sshll.u32 %s5, 4
          %s327 = int_to_ptr.hbm [resolvable:$true] %s326
          %s328 = sshll.u32 [#allocation8], 4
          %s329 = int_to_ptr.vmem [resolvable:$true] %s328
          %334 = dma.hbm_to_vmem [thread:$0]  %s327, 1024, %s329, [#allocation9], 64, 64, 4
        $region32: #{tpu_custom_call.1} parent=11 // pred_fallthru
          _
        // Predicated region
        $region33: #{tpu_custom_call.1} parent=11 // pred_check
          %p335 = pneg %p180
        $region34: #{tpu_custom_call.1} parent=11 // pred_check_branch
          %337 = sbr.rel (%p335) target = $region36
        $region35: #{tpu_custom_call.1} parent=11 // pred_region
          _
        $region36: #{tpu_custom_call.1} parent=11 // pred_fallthru
          _
        // Predicated region
        $region37: #{tpu_custom_call.1} parent=11 // pred_check
          %p338 = pneg %p201
        $region38: #{tpu_custom_call.1} parent=11 // pred_check_branch
          %340 = sbr.rel (%p338) target = $region40
        $region39: #{tpu_custom_call.1} parent=11 // pred_region
          %342 = vsyncadd [#allocation9], 0
          %s343 = sshll.u32 %s7, 4
          %s344 = int_to_ptr.hbm [resolvable:$true] %s343
          %s345 = sshll.u32 [#allocation10], 4
          %s346 = int_to_ptr.vmem [resolvable:$true] %s345
          %351 = dma.hbm_to_vmem [thread:$0]  %s344, 1024, %s346, [#allocation9], 64, 64, 4
        $region40: #{tpu_custom_call.1} parent=11 // pred_fallthru
          _
        // Predicated region
        $region41: #{tpu_custom_call.1} parent=11 // pred_check
          %p352 = pneg %p222
        $region42: #{tpu_custom_call.1} parent=11 // pred_check_branch
          %354 = sbr.rel (%p352) target = $region44
        $region43: #{tpu_custom_call.1} parent=11 // pred_region
          _
        $region44: #{tpu_custom_call.1} parent=11 // pred_fallthru
          _
      $region12: #{tpu_custom_call.1} parent=5 // pred_fallthru
        _
      %p355 = scmp.lt.s32.totalorder %s28, 2
      // Predicated region
      $region45: #{tpu_custom_call.1} parent=5 // pred_check
        %p356 = pneg %p355
      $region46: #{tpu_custom_call.1} parent=5 // pred_check_branch
        %358 = sbr.rel (%p356) target = $region48
      $region47: #{tpu_custom_call.1} parent=5 // pred_region
        // Predicated region
        $region49: #{tpu_custom_call.1} parent=47 // pred_check
          %p359 = pneg %p48
        $region50: #{tpu_custom_call.1} parent=47 // pred_check_branch
          %361 = sbr.rel (%p359) target = $region52
        $region51: #{tpu_custom_call.1} parent=47 // pred_region
          %s362 = sand.u32 %s38, 1
          %s363 = scalar_lea.sflag [#allocation3], %s362
          %s364 = sand.u32 %s38, 1
          %s365 = smul.addr %s364, 128
          %s366 = scalar_lea.vmem [#allocation2], %s365
          %s367 = smul.u32 16, %s28
          %369 = vsyncadd %s363, 0
          %s370 = smul.addr %s367, 8
          %s371 = scalar_lea.hbm %s0, %s370
          %s372 = sshll.u32 %s371, 4
          %s373 = int_to_ptr.hbm [resolvable:$true] %s372
          %s374 = sshll.u32 %s366, 4
          %s375 = int_to_ptr.vmem [resolvable:$true] %s374
          %380 = dma.hbm_to_vmem [thread:$0]  %s373, 2048, %s375, %s363, 128, 128, 8
        $region52: #{tpu_custom_call.1} parent=47 // pred_fallthru
          _
      $region48: #{tpu_custom_call.1} parent=5 // pred_fallthru
        _
      %p381 = scmp.le.s32.totalorder 1, %s28
      %p382 = scmp.lt.s32.totalorder %s28, 3
      %p383 = pnand %p381, %p382
      %p384 = pneg %p383
      // Predicated region
      $region53: #{tpu_custom_call.1} parent=5 // pred_check
        _
      $region54: #{tpu_custom_call.1} parent=5 // pred_check_branch
        %386 = sbr.rel (%p383) target = $region56
      $region55: #{tpu_custom_call.1} parent=5 // pred_region
        %s387 = ssub.s32 %s28, 1
        %s388 = sand.u32 %s41, 1
        %s389 = scalar_lea.sflag [#allocation3], %s388
        %s390 = sand.u32 %s41, 1
        %s391 = smul.addr %s390, 128
        %s392 = scalar_lea.vmem [#allocation2], %s391
        // Predicated region
        $region57: #{tpu_custom_call.1} parent=55 // pred_check
          %p393 = pneg %p54
        $region58: #{tpu_custom_call.1} parent=55 // pred_check_branch
          %395 = sbr.rel (%p393) target = $region60
        $region59: #{tpu_custom_call.1} parent=55 // pred_region
          %397 = dma.done %s389, 2048
        $region60: #{tpu_custom_call.1} parent=55 // pred_fallthru
          _
        // Predicated region
        $region61: #{tpu_custom_call.1} parent=55 // pred_check
          %p398 = pneg %p75
        $region62: #{tpu_custom_call.1} parent=55 // pred_check_branch
          %400 = sbr.rel (%p398) target = $region64
        $region63: #{tpu_custom_call.1} parent=55 // pred_region
          %402 = dma.done [#allocation6], 16
        $region64: #{tpu_custom_call.1} parent=55 // pred_fallthru
          _
        // Predicated region
        $region65: #{tpu_custom_call.1} parent=55 // pred_check
          %p403 = pneg %p117
        $region66: #{tpu_custom_call.1} parent=55 // pred_check_branch
          %405 = sbr.rel (%p403) target = $region68
        $region67: #{tpu_custom_call.1} parent=55 // pred_region
          %407 = dma.done [#allocation6], 1024
        $region68: #{tpu_custom_call.1} parent=55 // pred_fallthru
          _
        // Predicated region
        $region69: #{tpu_custom_call.1} parent=55 // pred_check
          %p408 = pneg %p159
        $region70: #{tpu_custom_call.1} parent=55 // pred_check_branch
          %410 = sbr.rel (%p408) target = $region72
        $region71: #{tpu_custom_call.1} parent=55 // pred_region
          %412 = dma.done [#allocation9], 1024
        $region72: #{tpu_custom_call.1} parent=55 // pred_fallthru
          _
        // Predicated region
        $region73: #{tpu_custom_call.1} parent=55 // pred_check
          %p413 = pneg %p201
        $region74: #{tpu_custom_call.1} parent=55 // pred_check_branch
          %415 = sbr.rel (%p413) target = $region76
        $region75: #{tpu_custom_call.1} parent=55 // pred_region
          %417 = dma.done [#allocation9], 1024
        $region76: #{tpu_custom_call.1} parent=55 // pred_fallthru
          _
        %s418 = sand.u32 %s41, 1
        %s419 = scalar_lea.sflag [#allocation3], %s418
        %s420 = sand.u32 %s41, 1
        %s421 = smul.addr %s420, 128
        %s422 = scalar_lea.vmem [#allocation2], %s421
        %p423 = pneg %p54
        %p424 = pneg %p51
        %p425 = pneg %p75
        %p426 = pneg %p72
        %p427 = pneg %p96
        %p428 = pneg %p93
        %p429 = pneg %p117
        %p430 = pneg %p114
        %p431 = pneg %p138
        %p432 = pneg %p135
        %p433 = pneg %p159
        %p434 = pneg %p156
        %p435 = pneg %p180
        %p436 = pneg %p177
        %p437 = pneg %p201
        %p438 = pneg %p198
        %p439 = pneg %p222
        %p440 = pneg %p219
        %p441 = pneg %p248
        %p442 = pneg %p245
        %s443 = sand.u32 %s235, 1
        %s444 = scalar_lea.sflag [#allocation4], %s443
        %s445 = sand.u32 %s235, 1
        %s446 = smul.addr %s445, 128
        %s447 = scalar_lea.vmem [#allocation11], %s446
        %p448 = pneg %p274
        %p449 = pneg %p271
        %s450 = sand.u32 %s261, 1
        %s451 = scalar_lea.sflag [#allocation13], %s450
        %s452 = sand.u32 %s261, 1
        %s453 = smul.addr %s452, 128
        %s454 = scalar_lea.vmem [#allocation12], %s453
        %s455 = smul.u32 16, %s33
        %s456 = smul.u32 16, %s33
        %s457 = smul.u32 16, %s33
        %v458 = vld [vmem:[%s392] sm:$0xff]
        %v459 = vld [vmem:[%s392 + $0x8] sm:$0xff]
        %v460 = vld [vmem:[%s392 + $0x10] sm:$0xff]
        %v461 = vld [vmem:[%s392 + $0x18] sm:$0xff]
        %v462 = vld [vmem:[%s392 + $0x20] sm:$0xff]
        %v463 = vld [vmem:[%s392 + $0x28] sm:$0xff]
        %v464 = vld [vmem:[%s392 + $0x30] sm:$0xff]
        %v465 = vld [vmem:[%s392 + $0x38] sm:$0xff]
        %v466 = vld [vmem:[%s392 + $0x40] sm:$0xff]
        %v467 = vld [vmem:[%s392 + $0x48] sm:$0xff]
        %v468 = vld [vmem:[%s392 + $0x50] sm:$0xff]
        %v469 = vld [vmem:[%s392 + $0x58] sm:$0xff]
        %v470 = vld [vmem:[%s392 + $0x60] sm:$0xff]
        %v471 = vld [vmem:[%s392 + $0x68] sm:$0xff]
        %v472 = vld [vmem:[%s392 + $0x70] sm:$0xff]
        %v473 = vld [vmem:[%s392 + $0x78] sm:$0xff]
        %v474 = vld [vmem:[#allocation5] sm:$0x1]
        %v476 = vperm.slane %v474, 0
        %v478 = vmul.f32 %v476, %v458
        %v479 = vmul.f32 %v476, %v459
        %v480 = vmul.f32 %v476, %v460
        %v481 = vmul.f32 %v476, %v461
        %v482 = vmul.f32 %v476, %v462
        %v483 = vmul.f32 %v476, %v463
        %v484 = vmul.f32 %v476, %v464
        %v485 = vmul.f32 %v476, %v465
        %v486 = vmul.f32 %v476, %v466
        %v487 = vmul.f32 %v476, %v467
        %v488 = vmul.f32 %v476, %v468
        %v489 = vmul.f32 %v476, %v469
        %v490 = vmul.f32 %v476, %v470
        %v491 = vmul.f32 %v476, %v471
        %v492 = vmul.f32 %v476, %v472
        %v493 = vmul.f32 %v476, %v473
        %v494 = vpack.c.bf16 %v479, %v478
        %v495 = vpack.c.bf16 %v481, %v480
        %v496 = vpack.c.bf16 %v483, %v482
        %v497 = vpack.c.bf16 %v485, %v484
        %v498 = vpack.c.bf16 %v487, %v486
        %v499 = vpack.c.bf16 %v489, %v488
        %v500 = vpack.c.bf16 %v491, %v490
        %v501 = vpack.c.bf16 %v493, %v492
        %v502 = vld [vmem:[#allocation7] sm:$0xf]
        %v503 = vld [vmem:[#allocation7 + $0x4] sm:$0xf]
        %v504 = vld [vmem:[#allocation7 + $0x8] sm:$0xf]
        %v505 = vld [vmem:[#allocation7 + $0xc] sm:$0xf]
        %v506 = vld [vmem:[#allocation7 + $0x10] sm:$0xf]
        %v507 = vld [vmem:[#allocation7 + $0x14] sm:$0xf]
        %v508 = vld [vmem:[#allocation7 + $0x18] sm:$0xf]
        %v509 = vld [vmem:[#allocation7 + $0x1c] sm:$0xf]
        %v510 = vld [vmem:[#allocation7 + $0x20] sm:$0xf]
        %v511 = vld [vmem:[#allocation7 + $0x24] sm:$0xf]
        %v512 = vld [vmem:[#allocation7 + $0x28] sm:$0xf]
        %v513 = vld [vmem:[#allocation7 + $0x2c] sm:$0xf]
        %v514 = vld [vmem:[#allocation7 + $0x30] sm:$0xf]
        %v515 = vld [vmem:[#allocation7 + $0x34] sm:$0xf]
        %v516 = vld [vmem:[#allocation7 + $0x38] sm:$0xf]
        %v517 = vld [vmem:[#allocation7 + $0x3c] sm:$0xf]
        %v518 = vld [vmem:[%s4] sm:$0x1]
        %v520 = vperm.slane %v518, 0
        %v538 = vunpack.c.l.b16 %v502
        %v539 = vunpack.c.l.b16 %v503
        %v540 = vunpack.c.l.b16 %v504
        %v541 = vunpack.c.l.b16 %v505
        %v542 = vunpack.c.l.b16 %v506
        %v543 = vunpack.c.l.b16 %v507
        %v544 = vunpack.c.l.b16 %v508
        %v545 = vunpack.c.l.b16 %v509
        %v546 = vunpack.c.l.b16 %v510
        %v547 = vunpack.c.l.b16 %v511
        %v548 = vunpack.c.l.b16 %v512
        %v549 = vunpack.c.l.b16 %v513
        %v550 = vunpack.c.l.b16 %v514
        %v551 = vunpack.c.l.b16 %v515
        %v552 = vunpack.c.l.b16 %v516
        %v553 = vunpack.c.l.b16 %v517
        %v554 = vpack.c.b16 %v539, %v538
        %v555 = vpack.c.b16 %v541, %v540
        %v556 = vpack.c.b16 %v543, %v542
        %v557 = vpack.c.b16 %v545, %v544
        %v558 = vpack.c.b16 %v547, %v546
        %v559 = vpack.c.b16 %v549, %v548
        %v560 = vpack.c.b16 %v551, %v550
        %v561 = vpack.c.b16 %v553, %v552
        %570 = vmatpush.bf16.msra.mxu0 %v561
        %571 = vmatpush.bf16.msra.mxu0 %v560
        %572 = vmatpush.bf16.msra.mxu0 %v559
        %573 = vmatpush.bf16.msra.mxu0 %v558
        %574 = vmatpush.bf16.msra.mxu0 %v557
        %575 = vmatpush.bf16.msra.mxu0 %v556
        %576 = vmatpush.bf16.msra.mxu0 %v555
        %577 = vmatpush.bf16.msra.mxu0 %v554
        %578 = vmatmul.bf16.gmra.mxu0 %v494
        %v579 = vpop.f32.mrf.mxu0
        %v580 = vadd.f32 %v520, %v579
        %v581 = vpop.f32.mrf.mxu0
        %v582 = vadd.f32 %v520, %v581
        %583 = vmatmul.bf16.gmra.mxu0 %v495
        %v584 = vpop.f32.mrf.mxu0
        %v585 = vadd.f32 %v520, %v584
        %v586 = vpop.f32.mrf.mxu0
        %v587 = vadd.f32 %v520, %v586
        %588 = vmatmul.bf16.gmra.mxu0 %v496
        %v589 = vpop.f32.mrf.mxu0
        %v590 = vadd.f32 %v520, %v589
        %v591 = vpop.f32.mrf.mxu0
        %v592 = vadd.f32 %v520, %v591
        %593 = vmatmul.bf16.gmra.mxu0 %v497
        %v594 = vpop.f32.mrf.mxu0
        %v595 = vadd.f32 %v520, %v594
        %v596 = vpop.f32.mrf.mxu0
        %v597 = vadd.f32 %v520, %v596
        %598 = vmatmul.bf16.gmra.mxu0 %v498
        %v599 = vpop.f32.mrf.mxu0
        %v600 = vadd.f32 %v520, %v599
        %v601 = vpop.f32.mrf.mxu0
        %v602 = vadd.f32 %v520, %v601
        %603 = vmatmul.bf16.gmra.mxu0 %v499
        %v604 = vpop.f32.mrf.mxu0
        %v605 = vadd.f32 %v520, %v604
        %v606 = vpop.f32.mrf.mxu0
        %v607 = vadd.f32 %v520, %v606
        %608 = vmatmul.bf16.gmra.mxu0 %v500
        %v609 = vpop.f32.mrf.mxu0
        %v610 = vadd.f32 %v520, %v609
        %v611 = vpop.f32.mrf.mxu0
        %v612 = vadd.f32 %v520, %v611
        %613 = vmatmul.bf16.gmra.mxu0 %v501
        %v614 = vpop.f32.mrf.mxu0
        %v615 = vadd.f32 %v520, %v614
        %v616 = vpop.f32.mrf.mxu0
        %v617 = vadd.f32 %v520, %v616
        %618 = vdwg.mxu0
        %v619 = vmax.f32 %v580, 0.0
        %v620 = vmax.f32 %v582, 0.0
        %v621 = vmax.f32 %v585, 0.0
        %v622 = vmax.f32 %v587, 0.0
        %v623 = vmax.f32 %v590, 0.0
        %v624 = vmax.f32 %v592, 0.0
        %v625 = vmax.f32 %v595, 0.0
        %v626 = vmax.f32 %v597, 0.0
        %v627 = vmax.f32 %v600, 0.0
        %v628 = vmax.f32 %v602, 0.0
        %v629 = vmax.f32 %v605, 0.0
        %v630 = vmax.f32 %v607, 0.0
        %v631 = vmax.f32 %v610, 0.0
        %v632 = vmax.f32 %v612, 0.0
        %v633 = vmax.f32 %v615, 0.0
        %v634 = vmax.f32 %v617, 0.0
        %v635 = vpack.c.bf16 %v620, %v619
        %v636 = vpack.c.bf16 %v622, %v621
        %v637 = vpack.c.bf16 %v624, %v623
        %v638 = vpack.c.bf16 %v626, %v625
        %v639 = vpack.c.bf16 %v628, %v627
        %v640 = vpack.c.bf16 %v630, %v629
        %v641 = vpack.c.bf16 %v632, %v631
        %v642 = vpack.c.bf16 %v634, %v633
        %v643 = vld [vmem:[#allocation8] sm:$0xf]
        %v644 = vld [vmem:[#allocation8 + $0x4] sm:$0xf]
        %v645 = vld [vmem:[#allocation8 + $0x8] sm:$0xf]
        %v646 = vld [vmem:[#allocation8 + $0xc] sm:$0xf]
        %v647 = vld [vmem:[#allocation8 + $0x10] sm:$0xf]
        %v648 = vld [vmem:[#allocation8 + $0x14] sm:$0xf]
        %v649 = vld [vmem:[#allocation8 + $0x18] sm:$0xf]
        %v650 = vld [vmem:[#allocation8 + $0x1c] sm:$0xf]
        %v651 = vld [vmem:[#allocation8 + $0x20] sm:$0xf]
        %v652 = vld [vmem:[#allocation8 + $0x24] sm:$0xf]
        %v653 = vld [vmem:[#allocation8 + $0x28] sm:$0xf]
        %v654 = vld [vmem:[#allocation8 + $0x2c] sm:$0xf]
        %v655 = vld [vmem:[#allocation8 + $0x30] sm:$0xf]
        %v656 = vld [vmem:[#allocation8 + $0x34] sm:$0xf]
        %v657 = vld [vmem:[#allocation8 + $0x38] sm:$0xf]
        %v658 = vld [vmem:[#allocation8 + $0x3c] sm:$0xf]
        %v659 = vld [vmem:[%s6] sm:$0x1]
        %v661 = vperm.slane %v659, 0
        %v679 = vunpack.c.l.b16 %v643
        %v680 = vunpack.c.l.b16 %v644
        %v681 = vunpack.c.l.b16 %v645
        %v682 = vunpack.c.l.b16 %v646
        %v683 = vunpack.c.l.b16 %v647
        %v684 = vunpack.c.l.b16 %v648
        %v685 = vunpack.c.l.b16 %v649
        %v686 = vunpack.c.l.b16 %v650
        %v687 = vunpack.c.l.b16 %v651
        %v688 = vunpack.c.l.b16 %v652
        %v689 = vunpack.c.l.b16 %v653
        %v690 = vunpack.c.l.b16 %v654
        %v691 = vunpack.c.l.b16 %v655
        %v692 = vunpack.c.l.b16 %v656
        %v693 = vunpack.c.l.b16 %v657
        %v694 = vunpack.c.l.b16 %v658
        %v695 = vpack.c.b16 %v680, %v679
        %v696 = vpack.c.b16 %v682, %v681
        %v697 = vpack.c.b16 %v684, %v683
        %v698 = vpack.c.b16 %v686, %v685
        %v699 = vpack.c.b16 %v688, %v687
        %v700 = vpack.c.b16 %v690, %v689
        %v701 = vpack.c.b16 %v692, %v691
        %v702 = vpack.c.b16 %v694, %v693
        %711 = vmatpush.bf16.msra.mxu0 %v702
        %712 = vmatpush.bf16.msra.mxu0 %v701
        %713 = vmatpush.bf16.msra.mxu0 %v700
        %714 = vmatpush.bf16.msra.mxu0 %v699
        %715 = vmatpush.bf16.msra.mxu0 %v698
        %716 = vmatpush.bf16.msra.mxu0 %v697
        %717 = vmatpush.bf16.msra.mxu0 %v696
        %718 = vmatpush.bf16.msra.mxu0 %v695
        %719 = vmatmul.bf16.gmra.mxu0 %v635
        %v720 = vpop.f32.mrf.mxu0
        %v721 = vadd.f32 %v661, %v720
        %v722 = vpop.f32.mrf.mxu0
        %v723 = vadd.f32 %v661, %v722
        %724 = vmatmul.bf16.gmra.mxu0 %v636
        %v725 = vpop.f32.mrf.mxu0
        %v726 = vadd.f32 %v661, %v725
        %v727 = vpop.f32.mrf.mxu0
        %v728 = vadd.f32 %v661, %v727
        %729 = vmatmul.bf16.gmra.mxu0 %v637
        %v730 = vpop.f32.mrf.mxu0
        %v731 = vadd.f32 %v661, %v730
        %v732 = vpop.f32.mrf.mxu0
        %v733 = vadd.f32 %v661, %v732
        %734 = vmatmul.bf16.gmra.mxu0 %v638
        %v735 = vpop.f32.mrf.mxu0
        %v736 = vadd.f32 %v661, %v735
        %v737 = vpop.f32.mrf.mxu0
        %v738 = vadd.f32 %v661, %v737
        %739 = vmatmul.bf16.gmra.mxu0 %v639
        %v740 = vpop.f32.mrf.mxu0
        %v741 = vadd.f32 %v661, %v740
        %v742 = vpop.f32.mrf.mxu0
        %v743 = vadd.f32 %v661, %v742
        %744 = vmatmul.bf16.gmra.mxu0 %v640
        %v745 = vpop.f32.mrf.mxu0
        %v746 = vadd.f32 %v661, %v745
        %v747 = vpop.f32.mrf.mxu0
        %v748 = vadd.f32 %v661, %v747
        %749 = vmatmul.bf16.gmra.mxu0 %v641
        %v750 = vpop.f32.mrf.mxu0
        %v751 = vadd.f32 %v661, %v750
        %v752 = vpop.f32.mrf.mxu0
        %v753 = vadd.f32 %v661, %v752
        %754 = vmatmul.bf16.gmra.mxu0 %v642
        %v755 = vpop.f32.mrf.mxu0
        %v756 = vadd.f32 %v661, %v755
        %v757 = vpop.f32.mrf.mxu0
        %v758 = vadd.f32 %v661, %v757
        %759 = vdwg.mxu0
        %760 = vst [vmem:[%s447] sm:$0xff] %v721
        %761 = vst [vmem:[%s447 + $0x8] sm:$0xff] %v723
        %762 = vst [vmem:[%s447 + $0x10] sm:$0xff] %v726
        %763 = vst [vmem:[%s447 + $0x18] sm:$0xff] %v728
        %764 = vst [vmem:[%s447 + $0x20] sm:$0xff] %v731
        %765 = vst [vmem:[%s447 + $0x28] sm:$0xff] %v733
        %766 = vst [vmem:[%s447 + $0x30] sm:$0xff] %v736
        %767 = vst [vmem:[%s447 + $0x38] sm:$0xff] %v738
        %768 = vst [vmem:[%s447 + $0x40] sm:$0xff] %v741
        %769 = vst [vmem:[%s447 + $0x48] sm:$0xff] %v743
        %770 = vst [vmem:[%s447 + $0x50] sm:$0xff] %v746
        %771 = vst [vmem:[%s447 + $0x58] sm:$0xff] %v748
        %772 = vst [vmem:[%s447 + $0x60] sm:$0xff] %v751
        %773 = vst [vmem:[%s447 + $0x68] sm:$0xff] %v753
        %774 = vst [vmem:[%s447 + $0x70] sm:$0xff] %v756
        %775 = vst [vmem:[%s447 + $0x78] sm:$0xff] %v758
        %v776 = vld [vmem:[%s2] sm:$0x1]
        %v778 = vperm.slane %v776, 0
        %v780 = vmul.f32 %v778, %v619
        %v781 = vmul.f32 %v778, %v620
        %v782 = vmul.f32 %v778, %v621
        %v783 = vmul.f32 %v778, %v622
        %v784 = vmul.f32 %v778, %v623
        %v785 = vmul.f32 %v778, %v624
        %v786 = vmul.f32 %v778, %v625
        %v787 = vmul.f32 %v778, %v626
        %v788 = vmul.f32 %v778, %v627
        %v789 = vmul.f32 %v778, %v628
        %v790 = vmul.f32 %v778, %v629
        %v791 = vmul.f32 %v778, %v630
        %v792 = vmul.f32 %v778, %v631
        %v793 = vmul.f32 %v778, %v632
        %v794 = vmul.f32 %v778, %v633
        %v795 = vmul.f32 %v778, %v634
        %v796 = vpack.c.bf16 %v781, %v780
        %v797 = vpack.c.bf16 %v783, %v782
        %v798 = vpack.c.bf16 %v785, %v784
        %v799 = vpack.c.bf16 %v787, %v786
        %v800 = vpack.c.bf16 %v789, %v788
        %v801 = vpack.c.bf16 %v791, %v790
        %v802 = vpack.c.bf16 %v793, %v792
        %v803 = vpack.c.bf16 %v795, %v794
        %v804 = vld [vmem:[#allocation10] sm:$0xf]
        %v805 = vld [vmem:[#allocation10 + $0x4] sm:$0xf]
        %v806 = vld [vmem:[#allocation10 + $0x8] sm:$0xf]
        %v807 = vld [vmem:[#allocation10 + $0xc] sm:$0xf]
        %v808 = vld [vmem:[#allocation10 + $0x10] sm:$0xf]
        %v809 = vld [vmem:[#allocation10 + $0x14] sm:$0xf]
        %v810 = vld [vmem:[#allocation10 + $0x18] sm:$0xf]
        %v811 = vld [vmem:[#allocation10 + $0x1c] sm:$0xf]
        %v812 = vld [vmem:[#allocation10 + $0x20] sm:$0xf]
        %v813 = vld [vmem:[#allocation10 + $0x24] sm:$0xf]
        %v814 = vld [vmem:[#allocation10 + $0x28] sm:$0xf]
        %v815 = vld [vmem:[#allocation10 + $0x2c] sm:$0xf]
        %v816 = vld [vmem:[#allocation10 + $0x30] sm:$0xf]
        %v817 = vld [vmem:[#allocation10 + $0x34] sm:$0xf]
        %v818 = vld [vmem:[#allocation10 + $0x38] sm:$0xf]
        %v819 = vld [vmem:[#allocation10 + $0x3c] sm:$0xf]
        %v820 = vld [vmem:[%s8] sm:$0x1]
        %v822 = vperm.slane %v820, 0
        %v840 = vunpack.c.l.b16 %v804
        %v841 = vunpack.c.l.b16 %v805
        %v842 = vunpack.c.l.b16 %v806
        %v843 = vunpack.c.l.b16 %v807
        %v844 = vunpack.c.l.b16 %v808
        %v845 = vunpack.c.l.b16 %v809
        %v846 = vunpack.c.l.b16 %v810
        %v847 = vunpack.c.l.b16 %v811
        %v848 = vunpack.c.l.b16 %v812
        %v849 = vunpack.c.l.b16 %v813
        %v850 = vunpack.c.l.b16 %v814
        %v851 = vunpack.c.l.b16 %v815
        %v852 = vunpack.c.l.b16 %v816
        %v853 = vunpack.c.l.b16 %v817
        %v854 = vunpack.c.l.b16 %v818
        %v855 = vunpack.c.l.b16 %v819
        %v856 = vpack.c.b16 %v841, %v840
        %v857 = vpack.c.b16 %v843, %v842
        %v858 = vpack.c.b16 %v845, %v844
        %v859 = vpack.c.b16 %v847, %v846
        %v860 = vpack.c.b16 %v849, %v848
        %v861 = vpack.c.b16 %v851, %v850
        %v862 = vpack.c.b16 %v853, %v852
        %v863 = vpack.c.b16 %v855, %v854
        %872 = vmatpush.bf16.msra.mxu0 %v863
        %873 = vmatpush.bf16.msra.mxu0 %v862
        %874 = vmatpush.bf16.msra.mxu0 %v861
        %875 = vmatpush.bf16.msra.mxu0 %v860
        %876 = vmatpush.bf16.msra.mxu0 %v859
        %877 = vmatpush.bf16.msra.mxu0 %v858
        %878 = vmatpush.bf16.msra.mxu0 %v857
        %879 = vmatpush.bf16.msra.mxu0 %v856
        %880 = vmatmul.bf16.gmra.mxu0 %v796
        %v881 = vpop.f32.mrf.mxu0
        %v882 = vadd.f32 %v822, %v881
        %v883 = vpop.f32.mrf.mxu0
        %v884 = vadd.f32 %v822, %v883
        %885 = vmatmul.bf16.gmra.mxu0 %v797
        %v886 = vpop.f32.mrf.mxu0
        %v887 = vadd.f32 %v822, %v886
        %v888 = vpop.f32.mrf.mxu0
        %v889 = vadd.f32 %v822, %v888
        %890 = vmatmul.bf16.gmra.mxu0 %v798
        %v891 = vpop.f32.mrf.mxu0
        %v892 = vadd.f32 %v822, %v891
        %v893 = vpop.f32.mrf.mxu0
        %v894 = vadd.f32 %v822, %v893
        %895 = vmatmul.bf16.gmra.mxu0 %v799
        %v896 = vpop.f32.mrf.mxu0
        %v897 = vadd.f32 %v822, %v896
        %v898 = vpop.f32.mrf.mxu0
        %v899 = vadd.f32 %v822, %v898
        %900 = vmatmul.bf16.gmra.mxu0 %v800
        %v901 = vpop.f32.mrf.mxu0
        %v902 = vadd.f32 %v822, %v901
        %v903 = vpop.f32.mrf.mxu0
        %v904 = vadd.f32 %v822, %v903
        %905 = vmatmul.bf16.gmra.mxu0 %v801
        %v906 = vpop.f32.mrf.mxu0
        %v907 = vadd.f32 %v822, %v906
        %v908 = vpop.f32.mrf.mxu0
        %v909 = vadd.f32 %v822, %v908
        %910 = vmatmul.bf16.gmra.mxu0 %v802
        %v911 = vpop.f32.mrf.mxu0
        %v912 = vadd.f32 %v822, %v911
        %v913 = vpop.f32.mrf.mxu0
        %v914 = vadd.f32 %v822, %v913
        %915 = vmatmul.bf16.gmra.mxu0 %v803
        %v916 = vpop.f32.mrf.mxu0
        %v917 = vadd.f32 %v822, %v916
        %v918 = vpop.f32.mrf.mxu0
        %v919 = vadd.f32 %v822, %v918
        %920 = vdwg.mxu0
        %v921 = vxor.u32 %v882, 2147483648
        %v922 = vxor.u32 %v884, 2147483648
        %v923 = vxor.u32 %v887, 2147483648
        %v924 = vxor.u32 %v889, 2147483648
        %v925 = vxor.u32 %v892, 2147483648
        %v926 = vxor.u32 %v894, 2147483648
        %v927 = vxor.u32 %v897, 2147483648
        %v928 = vxor.u32 %v899, 2147483648
        %v929 = vxor.u32 %v902, 2147483648
        %v930 = vxor.u32 %v904, 2147483648
        %v931 = vxor.u32 %v907, 2147483648
        %v932 = vxor.u32 %v909, 2147483648
        %v933 = vxor.u32 %v912, 2147483648
        %v934 = vxor.u32 %v914, 2147483648
        %v935 = vxor.u32 %v917, 2147483648
        %v936 = vxor.u32 %v919, 2147483648
        %v937 = vmul.f32 %v921, 1.442695
        %v938 = vpow.pop %v937
        %v939 = vmul.f32 %v922, 1.442695
        %v940 = vpow.pop %v939
        %v941 = vmul.f32 %v923, 1.442695
        %v942 = vpow.pop %v941
        %v943 = vmul.f32 %v924, 1.442695
        %v944 = vpow.pop %v943
        %v945 = vmul.f32 %v925, 1.442695
        %v946 = vpow.pop %v945
        %v947 = vmul.f32 %v926, 1.442695
        %v948 = vpow.pop %v947
        %v949 = vmul.f32 %v927, 1.442695
        %v950 = vpow.pop %v949
        %v951 = vmul.f32 %v928, 1.442695
        %v952 = vpow.pop %v951
        %v953 = vmul.f32 %v929, 1.442695
        %v954 = vpow.pop %v953
        %v955 = vmul.f32 %v930, 1.442695
        %v956 = vpow.pop %v955
        %v957 = vmul.f32 %v931, 1.442695
        %v958 = vpow.pop %v957
        %v959 = vmul.f32 %v932, 1.442695
        %v960 = vpow.pop %v959
        %v961 = vmul.f32 %v933, 1.442695
        %v962 = vpow.pop %v961
        %v963 = vmul.f32 %v934, 1.442695
        %v964 = vpow.pop %v963
        %v965 = vmul.f32 %v935, 1.442695
        %v966 = vpow.pop %v965
        %v967 = vmul.f32 %v936, 1.442695
        %v968 = vpow.pop %v967
        %v969 = vadd.f32 %v938, 1.0
        %v970 = vadd.f32 %v940, 1.0
        %v971 = vadd.f32 %v942, 1.0
        %v972 = vadd.f32 %v944, 1.0
        %v973 = vadd.f32 %v946, 1.0
        %v974 = vadd.f32 %v948, 1.0
        %v975 = vadd.f32 %v950, 1.0
        %v976 = vadd.f32 %v952, 1.0
        %v977 = vadd.f32 %v954, 1.0
        %v978 = vadd.f32 %v956, 1.0
        %v979 = vadd.f32 %v958, 1.0
        %v980 = vadd.f32 %v960, 1.0
        %v981 = vadd.f32 %v962, 1.0
        %v982 = vadd.f32 %v964, 1.0
        %v983 = vadd.f32 %v966, 1.0
        %v984 = vadd.f32 %v968, 1.0
        %v985 = vrcp.pop %v969
        %v986 = vmul.f32 %v969, %v985
        %v987 = vsub.f32 1.0, %v986
        %v988 = vmul.f32 %v985, %v987
        %v989 = vadd.f32 %v985, %v988
        %vm990 = vweird.f32 %v969
        %vm991 = vweird.f32 %v985
        %vm992 = vmor %vm990, %vm991
        %v993 = vsel %vm992, %v985, %v989
        %v994 = vand.u32 2147483647, %v969
        %vm995 = vcmp.eq.f32.partialorder %v994, 8.507059e+37
        %v996 = vand.u32 %v969, 2147483648
        %v997 = vor.u32 1.1754944e-38, %v996
        %v998 = vsel %vm995, %v997, %v993
        %v999 = vmul.f32 1.0, %v998
        %v1000 = vrcp.pop %v970
        %v1001 = vmul.f32 %v970, %v1000
        %v1002 = vsub.f32 1.0, %v1001
        %v1003 = vmul.f32 %v1000, %v1002
        %v1004 = vadd.f32 %v1000, %v1003
        %vm1005 = vweird.f32 %v970
        %vm1006 = vweird.f32 %v1000
        %vm1007 = vmor %vm1005, %vm1006
        %v1008 = vsel %vm1007, %v1000, %v1004
        %v1009 = vand.u32 2147483647, %v970
        %vm1010 = vcmp.eq.f32.partialorder %v1009, 8.507059e+37
        %v1011 = vand.u32 %v970, 2147483648
        %v1012 = vor.u32 1.1754944e-38, %v1011
        %v1013 = vsel %vm1010, %v1012, %v1008
        %v1014 = vmul.f32 1.0, %v1013
        %v1015 = vrcp.pop %v971
        %v1016 = vmul.f32 %v971, %v1015
        %v1017 = vsub.f32 1.0, %v1016
        %v1018 = vmul.f32 %v1015, %v1017
        %v1019 = vadd.f32 %v1015, %v1018
        %vm1020 = vweird.f32 %v971
        %vm1021 = vweird.f32 %v1015
        %vm1022 = vmor %vm1020, %vm1021
        %v1023 = vsel %vm1022, %v1015, %v1019
        %v1024 = vand.u32 2147483647, %v971
        %vm1025 = vcmp.eq.f32.partialorder %v1024, 8.507059e+37
        %v1026 = vand.u32 %v971, 2147483648
        %v1027 = vor.u32 1.1754944e-38, %v1026
        %v1028 = vsel %vm1025, %v1027, %v1023
        %v1029 = vmul.f32 1.0, %v1028
        %v1030 = vrcp.pop %v972
        %v1031 = vmul.f32 %v972, %v1030
        %v1032 = vsub.f32 1.0, %v1031
        %v1033 = vmul.f32 %v1030, %v1032
        %v1034 = vadd.f32 %v1030, %v1033
        %vm1035 = vweird.f32 %v972
        %vm1036 = vweird.f32 %v1030
        %vm1037 = vmor %vm1035, %vm1036
        %v1038 = vsel %vm1037, %v1030, %v1034
        %v1039 = vand.u32 2147483647, %v972
        %vm1040 = vcmp.eq.f32.partialorder %v1039, 8.507059e+37
        %v1041 = vand.u32 %v972, 2147483648
        %v1042 = vor.u32 1.1754944e-38, %v1041
        %v1043 = vsel %vm1040, %v1042, %v1038
        %v1044 = vmul.f32 1.0, %v1043
        %v1045 = vrcp.pop %v973
        %v1046 = vmul.f32 %v973, %v1045
        %v1047 = vsub.f32 1.0, %v1046
        %v1048 = vmul.f32 %v1045, %v1047
        %v1049 = vadd.f32 %v1045, %v1048
        %vm1050 = vweird.f32 %v973
        %vm1051 = vweird.f32 %v1045
        %vm1052 = vmor %vm1050, %vm1051
        %v1053 = vsel %vm1052, %v1045, %v1049
        %v1054 = vand.u32 2147483647, %v973
        %vm1055 = vcmp.eq.f32.partialorder %v1054, 8.507059e+37
        %v1056 = vand.u32 %v973, 2147483648
        %v1057 = vor.u32 1.1754944e-38, %v1056
        %v1058 = vsel %vm1055, %v1057, %v1053
        %v1059 = vmul.f32 1.0, %v1058
        %v1060 = vrcp.pop %v974
        %v1061 = vmul.f32 %v974, %v1060
        %v1062 = vsub.f32 1.0, %v1061
        %v1063 = vmul.f32 %v1060, %v1062
        %v1064 = vadd.f32 %v1060, %v1063
        %vm1065 = vweird.f32 %v974
        %vm1066 = vweird.f32 %v1060
        %vm1067 = vmor %vm1065, %vm1066
        %v1068 = vsel %vm1067, %v1060, %v1064
        %v1069 = vand.u32 2147483647, %v974
        %vm1070 = vcmp.eq.f32.partialorder %v1069, 8.507059e+37
        %v1071 = vand.u32 %v974, 2147483648
        %v1072 = vor.u32 1.1754944e-38, %v1071
        %v1073 = vsel %vm1070, %v1072, %v1068
        %v1074 = vmul.f32 1.0, %v1073
        %v1075 = vrcp.pop %v975
        %v1076 = vmul.f32 %v975, %v1075
        %v1077 = vsub.f32 1.0, %v1076
        %v1078 = vmul.f32 %v1075, %v1077
        %v1079 = vadd.f32 %v1075, %v1078
        %vm1080 = vweird.f32 %v975
        %vm1081 = vweird.f32 %v1075
        %vm1082 = vmor %vm1080, %vm1081
        %v1083 = vsel %vm1082, %v1075, %v1079
        %v1084 = vand.u32 2147483647, %v975
        %vm1085 = vcmp.eq.f32.partialorder %v1084, 8.507059e+37
        %v1086 = vand.u32 %v975, 2147483648
        %v1087 = vor.u32 1.1754944e-38, %v1086
        %v1088 = vsel %vm1085, %v1087, %v1083
        %v1089 = vmul.f32 1.0, %v1088
        %v1090 = vrcp.pop %v976
        %v1091 = vmul.f32 %v976, %v1090
        %v1092 = vsub.f32 1.0, %v1091
        %v1093 = vmul.f32 %v1090, %v1092
        %v1094 = vadd.f32 %v1090, %v1093
        %vm1095 = vweird.f32 %v976
        %vm1096 = vweird.f32 %v1090
        %vm1097 = vmor %vm1095, %vm1096
        %v1098 = vsel %vm1097, %v1090, %v1094
        %v1099 = vand.u32 2147483647, %v976
        %vm1100 = vcmp.eq.f32.partialorder %v1099, 8.507059e+37
        %v1101 = vand.u32 %v976, 2147483648
        %v1102 = vor.u32 1.1754944e-38, %v1101
        %v1103 = vsel %vm1100, %v1102, %v1098
        %v1104 = vmul.f32 1.0, %v1103
        %v1105 = vrcp.pop %v977
        %v1106 = vmul.f32 %v977, %v1105
        %v1107 = vsub.f32 1.0, %v1106
        %v1108 = vmul.f32 %v1105, %v1107
        %v1109 = vadd.f32 %v1105, %v1108
        %vm1110 = vweird.f32 %v977
        %vm1111 = vweird.f32 %v1105
        %vm1112 = vmor %vm1110, %vm1111
        %v1113 = vsel %vm1112, %v1105, %v1109
        %v1114 = vand.u32 2147483647, %v977
        %vm1115 = vcmp.eq.f32.partialorder %v1114, 8.507059e+37
        %v1116 = vand.u32 %v977, 2147483648
        %v1117 = vor.u32 1.1754944e-38, %v1116
        %v1118 = vsel %vm1115, %v1117, %v1113
        %v1119 = vmul.f32 1.0, %v1118
        %v1120 = vrcp.pop %v978
        %v1121 = vmul.f32 %v978, %v1120
        %v1122 = vsub.f32 1.0, %v1121
        %v1123 = vmul.f32 %v1120, %v1122
        %v1124 = vadd.f32 %v1120, %v1123
        %vm1125 = vweird.f32 %v978
        %vm1126 = vweird.f32 %v1120
        %vm1127 = vmor %vm1125, %vm1126
        %v1128 = vsel %vm1127, %v1120, %v1124
        %v1129 = vand.u32 2147483647, %v978
        %vm1130 = vcmp.eq.f32.partialorder %v1129, 8.507059e+37
        %v1131 = vand.u32 %v978, 2147483648
        %v1132 = vor.u32 1.1754944e-38, %v1131
        %v1133 = vsel %vm1130, %v1132, %v1128
        %v1134 = vmul.f32 1.0, %v1133
        %v1135 = vrcp.pop %v979
        %v1136 = vmul.f32 %v979, %v1135
        %v1137 = vsub.f32 1.0, %v1136
        %v1138 = vmul.f32 %v1135, %v1137
        %v1139 = vadd.f32 %v1135, %v1138
        %vm1140 = vweird.f32 %v979
        %vm1141 = vweird.f32 %v1135
        %vm1142 = vmor %vm1140, %vm1141
        %v1143 = vsel %vm1142, %v1135, %v1139
        %v1144 = vand.u32 2147483647, %v979
        %vm1145 = vcmp.eq.f32.partialorder %v1144, 8.507059e+37
        %v1146 = vand.u32 %v979, 2147483648
        %v1147 = vor.u32 1.1754944e-38, %v1146
        %v1148 = vsel %vm1145, %v1147, %v1143
        %v1149 = vmul.f32 1.0, %v1148
        %v1150 = vrcp.pop %v980
        %v1151 = vmul.f32 %v980, %v1150
        %v1152 = vsub.f32 1.0, %v1151
        %v1153 = vmul.f32 %v1150, %v1152
        %v1154 = vadd.f32 %v1150, %v1153
        %vm1155 = vweird.f32 %v980
        %vm1156 = vweird.f32 %v1150
        %vm1157 = vmor %vm1155, %vm1156
        %v1158 = vsel %vm1157, %v1150, %v1154
        %v1159 = vand.u32 2147483647, %v980
        %vm1160 = vcmp.eq.f32.partialorder %v1159, 8.507059e+37
        %v1161 = vand.u32 %v980, 2147483648
        %v1162 = vor.u32 1.1754944e-38, %v1161
        %v1163 = vsel %vm1160, %v1162, %v1158
        %v1164 = vmul.f32 1.0, %v1163
        %v1165 = vrcp.pop %v981
        %v1166 = vmul.f32 %v981, %v1165
        %v1167 = vsub.f32 1.0, %v1166
        %v1168 = vmul.f32 %v1165, %v1167
        %v1169 = vadd.f32 %v1165, %v1168
        %vm1170 = vweird.f32 %v981
        %vm1171 = vweird.f32 %v1165
        %vm1172 = vmor %vm1170, %vm1171
        %v1173 = vsel %vm1172, %v1165, %v1169
        %v1174 = vand.u32 2147483647, %v981
        %vm1175 = vcmp.eq.f32.partialorder %v1174, 8.507059e+37
        %v1176 = vand.u32 %v981, 2147483648
        %v1177 = vor.u32 1.1754944e-38, %v1176
        %v1178 = vsel %vm1175, %v1177, %v1173
        %v1179 = vmul.f32 1.0, %v1178
        %v1180 = vrcp.pop %v982
        %v1181 = vmul.f32 %v982, %v1180
        %v1182 = vsub.f32 1.0, %v1181
        %v1183 = vmul.f32 %v1180, %v1182
        %v1184 = vadd.f32 %v1180, %v1183
        %vm1185 = vweird.f32 %v982
        %vm1186 = vweird.f32 %v1180
        %vm1187 = vmor %vm1185, %vm1186
        %v1188 = vsel %vm1187, %v1180, %v1184
        %v1189 = vand.u32 2147483647, %v982
        %vm1190 = vcmp.eq.f32.partialorder %v1189, 8.507059e+37
        %v1191 = vand.u32 %v982, 2147483648
        %v1192 = vor.u32 1.1754944e-38, %v1191
        %v1193 = vsel %vm1190, %v1192, %v1188
        %v1194 = vmul.f32 1.0, %v1193
        %v1195 = vrcp.pop %v983
        %v1196 = vmul.f32 %v983, %v1195
        %v1197 = vsub.f32 1.0, %v1196
        %v1198 = vmul.f32 %v1195, %v1197
        %v1199 = vadd.f32 %v1195, %v1198
        %vm1200 = vweird.f32 %v983
        %vm1201 = vweird.f32 %v1195
        %vm1202 = vmor %vm1200, %vm1201
        %v1203 = vsel %vm1202, %v1195, %v1199
        %v1204 = vand.u32 2147483647, %v983
        %vm1205 = vcmp.eq.f32.partialorder %v1204, 8.507059e+37
        %v1206 = vand.u32 %v983, 2147483648
        %v1207 = vor.u32 1.1754944e-38, %v1206
        %v1208 = vsel %vm1205, %v1207, %v1203
        %v1209 = vmul.f32 1.0, %v1208
        %v1210 = vrcp.pop %v984
        %v1211 = vmul.f32 %v984, %v1210
        %v1212 = vsub.f32 1.0, %v1211
        %v1213 = vmul.f32 %v1210, %v1212
        %v1214 = vadd.f32 %v1210, %v1213
        %vm1215 = vweird.f32 %v984
        %vm1216 = vweird.f32 %v1210
        %vm1217 = vmor %vm1215, %vm1216
        %v1218 = vsel %vm1217, %v1210, %v1214
        %v1219 = vand.u32 2147483647, %v984
        %vm1220 = vcmp.eq.f32.partialorder %v1219, 8.507059e+37
        %v1221 = vand.u32 %v984, 2147483648
        %v1222 = vor.u32 1.1754944e-38, %v1221
        %v1223 = vsel %vm1220, %v1222, %v1218
        %v1224 = vmul.f32 1.0, %v1223
        %1225 = vst [vmem:[%s454] sm:$0xff] %v999
        %1226 = vst [vmem:[%s454 + $0x8] sm:$0xff] %v1014
        %1227 = vst [vmem:[%s454 + $0x10] sm:$0xff] %v1029
        %1228 = vst [vmem:[%s454 + $0x18] sm:$0xff] %v1044
        %1229 = vst [vmem:[%s454 + $0x20] sm:$0xff] %v1059
        %1230 = vst [vmem:[%s454 + $0x28] sm:$0xff] %v1074
        %1231 = vst [vmem:[%s454 + $0x30] sm:$0xff] %v1089
        %1232 = vst [vmem:[%s454 + $0x38] sm:$0xff] %v1104
        %1233 = vst [vmem:[%s454 + $0x40] sm:$0xff] %v1119
        %1234 = vst [vmem:[%s454 + $0x48] sm:$0xff] %v1134
        %1235 = vst [vmem:[%s454 + $0x50] sm:$0xff] %v1149
        %1236 = vst [vmem:[%s454 + $0x58] sm:$0xff] %v1164
        %1237 = vst [vmem:[%s454 + $0x60] sm:$0xff] %v1179
        %1238 = vst [vmem:[%s454 + $0x68] sm:$0xff] %v1194
        %1239 = vst [vmem:[%s454 + $0x70] sm:$0xff] %v1209
        %1240 = vst [vmem:[%s454 + $0x78] sm:$0xff] %v1224
        %s1241 = sand.u32 %s235, 1
        %s1242 = scalar_lea.sflag [#allocation4], %s1241
        %s1243 = sand.u32 %s235, 1
        %s1244 = smul.addr %s1243, 128
        %s1245 = scalar_lea.vmem [#allocation11], %s1244
        %s1246 = sand.u32 %s261, 1
        %s1247 = scalar_lea.sflag [#allocation13], %s1246
        %s1248 = sand.u32 %s261, 1
        %s1249 = smul.addr %s1248, 128
        %s1250 = scalar_lea.vmem [#allocation12], %s1249
        // Predicated region
        $region77: #{tpu_custom_call.1} parent=55 // pred_check
          %p1251 = pneg %p245
        $region78: #{tpu_custom_call.1} parent=55 // pred_check_branch
          %1253 = sbr.rel (%p1251) target = $region80
        $region79: #{tpu_custom_call.1} parent=55 // pred_region
          %s1254 = smul.u32 16, %s33
          %1256 = vsyncadd %s1242, 0
          %s1257 = smul.addr %s1254, 8
          %s1258 = scalar_lea.hbm %s9, %s1257
          %s1259 = sshll.u32 %s1245, 4
          %s1260 = int_to_ptr.vmem [resolvable:$true] %s1259
          %s1261 = sshll.u32 %s1258, 4
          %s1262 = int_to_ptr.hbm [resolvable:$true] %s1261
          %1267 = dma.vmem_to_hbm [thread:$0]  %s1260, 2048, %s1262, %s1242, 128, 128, 8
        $region80: #{tpu_custom_call.1} parent=55 // pred_fallthru
          _
        // Predicated region
        $region81: #{tpu_custom_call.1} parent=55 // pred_check
          %p1268 = pneg %p271
        $region82: #{tpu_custom_call.1} parent=55 // pred_check_branch
          %1270 = sbr.rel (%p1268) target = $region84
        $region83: #{tpu_custom_call.1} parent=55 // pred_region
          %s1271 = smul.u32 16, %s33
          %1273 = vsyncadd %s1247, 0
          %s1274 = smul.addr %s1271, 8
          %s1275 = scalar_lea.hbm %s10, %s1274
          %s1276 = sshll.u32 %s1250, 4
          %s1277 = int_to_ptr.vmem [resolvable:$true] %s1276
          %s1278 = sshll.u32 %s1275, 4
          %s1279 = int_to_ptr.hbm [resolvable:$true] %s1278
          %1284 = dma.vmem_to_hbm [thread:$0]  %s1277, 2048, %s1279, %s1247, 128, 128, 8
        $region84: #{tpu_custom_call.1} parent=55 // pred_fallthru
          _
      $region56: #{tpu_custom_call.1} parent=5 // pred_fallthru
        _
      %p1285 = scmp.le.s32.totalorder 2, %s28
      // Predicated region
      $region85: #{tpu_custom_call.1} parent=5 // pred_check
        %p1286 = pneg %p1285
      $region86: #{tpu_custom_call.1} parent=5 // pred_check_branch
        %1288 = sbr.rel (%p1286) target = $region88
      $region87: #{tpu_custom_call.1} parent=5 // pred_region
        %s1289 = ssub.s32 %s28, 2
        // Predicated region
        $region89: #{tpu_custom_call.1} parent=87 // pred_check
          %p1290 = pneg %p251
        $region90: #{tpu_custom_call.1} parent=87 // pred_check_branch
          %1292 = sbr.rel (%p1290) target = $region92
        $region91: #{tpu_custom_call.1} parent=87 // pred_region
          %s1293 = sand.u32 %s236, 1
          %s1294 = scalar_lea.sflag [#allocation4], %s1293
          %s1295 = sand.u32 %s236, 1
          %s1296 = smul.addr %s1295, 128
          %s1297 = scalar_lea.vmem [#allocation11], %s1296
          %1299 = dma.done %s1294, 2048
        $region92: #{tpu_custom_call.1} parent=87 // pred_fallthru
          _
        // Predicated region
        $region93: #{tpu_custom_call.1} parent=87 // pred_check
          %p1300 = pneg %p277
        $region94: #{tpu_custom_call.1} parent=87 // pred_check_branch
          %1302 = sbr.rel (%p1300) target = $region96
        $region95: #{tpu_custom_call.1} parent=87 // pred_region
          %s1303 = sand.u32 %s262, 1
          %s1304 = scalar_lea.sflag [#allocation13], %s1303
          %s1305 = sand.u32 %s262, 1
          %s1306 = smul.addr %s1305, 128
          %s1307 = scalar_lea.vmem [#allocation12], %s1306
          %1309 = dma.done %s1304, 2048
        $region96: #{tpu_custom_call.1} parent=87 // pred_fallthru
          _
      $region88: #{tpu_custom_call.1} parent=5 // pred_fallthru
        _
    $region6: #{tpu_custom_call.1} parent=1 // loop_footer
      %s32 = sadd.s32 1, %s28
    $region7: #{tpu_custom_call.1} parent=1 // loop_footer_branch
      %27 = sbr.rel target = $region3
    $region8: #{tpu_custom_call.1} parent=1 // loop_exit
      _
    %1310 = vsyncpa [#allocation3], 1
    %s1311 = scalar_lea.sflag [#allocation3], 1
    %1312 = vsyncpa %s1311, 1
    %1313 = vsyncpa [#allocation6], 1
    %1314 = vsyncpa [#allocation9], 1
    %1315 = vsyncpa [#allocation4], 1
    %s1316 = scalar_lea.sflag [#allocation4], 1
    %1317 = vsyncpa %s1316, 1
    %1318 = vsyncpa [#allocation13], 1
    %s1319 = scalar_lea.sflag [#allocation13], 1
    %1320 = vsyncpa %s1319, 1

</llo_original>
